<compile_context>
chip_gen: v6e
topology: v6e:2x2x1
jax: 0.10.0
libtpu: 0.0.40
codegen_flags: <defaults>
</compile_context>

<pallas_src>
import jax
import jax.numpy as jnp
from jax.experimental import pallas as pl
from jax.experimental.pallas import tpu as pltpu

LANE = 128


def _round_up(n, m):
    return ((n + m - 1) // m) * m


def bow_kernel(x_ref, w1_ref, b1_ref, w2_ref, b2_ref, o_ref):
    # hidden = ReLU(x @ W1 + b1): bf16 (or f32) operands, f32 MXU accumulation.
    h = jnp.dot(x_ref[...], w1_ref[...], preferred_element_type=jnp.float32)
    h = jnp.maximum(h + b1_ref[...], 0.0)          # f32 epilogue (no bf16 VPU needed)
    # out = hidden @ W2 + b2; N is padded to 128 -> lane-dense unmasked stores.
    y = jnp.dot(h, w2_ref[...], preferred_element_type=jnp.float32)
    o_ref[...] = (y + b2_ref[...]).astype(o_ref.dtype)


def bow_forward(x, w1, b1, w2, b2, *, stream_dtype=jnp.bfloat16,
                tile_b=None, vmem_budget_bytes=16 << 20):
    """ReLU(x @ w1 + b1) @ w2 + b2 ;  w1:[V,16], w2:[16,6] (torch weights transposed)."""
    B, V = x.shape
    H = w1.shape[1]
    O = w2.shape[1]

    # ---- lane-dense padding -------------------------------------------------
    V_pad = _round_up(V, LANE)     # dense 128-lane rows for x / W1
    O_pad = _round_up(O, LANE)     # lane-dense output block

    x_p = x if V_pad == V else jnp.pad(x, ((0, 0), (0, V_pad - V)))
    w1_p = w1 if V_pad == V else jnp.pad(w1, ((0, V_pad - V), (0, 0)))
    w2_p = jnp.pad(w2, ((0, 0), (0, O_pad - O))).astype(jnp.float32)
    b2_p = jnp.pad(b2, (0, O_pad - O)).reshape(1, O_pad).astype(jnp.float32)
    b1_2d = b1.reshape(1, H).astype(jnp.float32)

    # bf16 streaming of the big HBM operands; accumulation stays f32 on the MXU.
    x_p = x_p.astype(stream_dtype)
    w1_p = w1_p.astype(stream_dtype)

    # ---- batch tile sized against VMEM (double-buffered x tile + out tile) --
    stream_bytes = jnp.dtype(stream_dtype).itemsize
    weight_bytes = V_pad * H * stream_bytes + H * O_pad * 4 + (H + O_pad) * 4
    per_row = 2 * V_pad * stream_bytes + 2 * O_pad * 4
    if tile_b is None:
        max_rows = max((vmem_budget_bytes - weight_bytes) // per_row, 8)
        tile_b = min(_round_up(B, 8), (max_rows // 8) * 8)
        # keep >=2 grid steps when the batch allows it (v7x megacore sharding)
        if B >= 16:
            tile_b = min(tile_b, _round_up((B + 1) // 2, 8))
    tile_b = max(8, int(tile_b))

    grid = (pl.cdiv(B, tile_b),)

    cost = pl.CostEstimate(
        flops=2 * B * (V_pad * H + H * O_pad),
        transcendentals=0,
        bytes_accessed=B * V_pad * stream_bytes + B * O_pad * 4 + weight_bytes,
    )

    out_padded = pl.pallas_call(
        bow_kernel,
        out_shape=jax.ShapeDtypeStruct((B, O_pad), jnp.float32),
        grid_spec=pltpu.PrefetchScalarGridSpec(
            num_scalar_prefetch=0,
            grid=grid,
            in_specs=[
                pl.BlockSpec((tile_b, V_pad), lambda i: (i, 0)),  # x tile over batch
                pl.BlockSpec((V_pad, H), lambda i: (0, 0)),       # W1 resident
                pl.BlockSpec((1, H), lambda i: (0, 0)),           # b1
                pl.BlockSpec((H, O_pad), lambda i: (0, 0)),       # W2 (lane-padded)
                pl.BlockSpec((1, O_pad), lambda i: (0, 0)),       # b2 (lane-padded)
            ],
            out_specs=pl.BlockSpec((tile_b, O_pad), lambda i: (i, 0)),
        ),
        compiler_params=pltpu.CompilerParams(
            dimension_semantics=("parallel",),
            vmem_limit_bytes=32 << 20,
        ),
        cost_estimate=cost,
    )(x_p, w1_p, b1_2d, w2_p, b2_p)

    return out_padded[:, :O]


def init_params(key, vocab_size, hidden=16, out=6, dtype=jnp.float32):
    # Mimics torch.nn.Linear default init: U(-1/sqrt(fan_in), 1/sqrt(fan_in))
    k1, k2, k3, k4 = jax.random.split(key, 4)
    lim1 = 1.0 / jnp.sqrt(vocab_size)
    lim2 = 1.0 / jnp.sqrt(hidden)
    w1 = jax.random.uniform(k1, (vocab_size, hidden), dtype, -lim1, lim1)
    b1 = jax.random.uniform(k2, (hidden,), dtype, -lim1, lim1)
    w2 = jax.random.uniform(k3, (hidden, out), dtype, -lim2, lim2)
    b2 = jax.random.uniform(k4, (out,), dtype, -lim2, lim2)
    return w1, b1, w2, b2


if __name__ == "__main__":
    key = jax.random.PRNGKey(0)
    batch, vocab_size = 8, 32

    kx, kp = jax.random.split(key)
    # Bag-of-words style counts (non-negative), float32 like torch default.
    x = jax.random.uniform(kx, (batch, vocab_size), jnp.float32, 0.0, 3.0)
    w1, b1, w2, b2 = init_params(kp, vocab_size)

    # Pure-JAX f32 reference.
    ref = jnp.maximum(x @ w1 + b1, 0.0) @ w2 + b2

    # 1) Exactness check: f32-streamed kernel must match the f32 reference tightly.
    y32 = bow_forward(x, w1, b1, w2, b2, stream_dtype=jnp.float32)
    y32 = jax.block_until_ready(y32)
    assert y32.shape == (batch, 6)
    assert jnp.allclose(y32, ref, atol=1e-5, rtol=1e-5)

    # 2) Optimized bf16-streaming path (default): matches f32 ref within bf16 tolerance.
    y = bow_forward(x, w1, b1, w2, b2)
    y = jax.block_until_ready(y)
    assert y.shape == (batch, 6)
    assert jnp.allclose(y, ref, atol=5e-2, rtol=5e-2)

    print("KERNEL_OK")
</pallas_src>

<mosaic_0001>
module attributes {stable_mosaic.version = 11 : i64} {
  func.func @bow_kernel(%arg0: i32, %arg1: memref<8x128xf32, #tpu.memory_space<vmem>>, %arg2: memref<128x16xf32, #tpu.memory_space<vmem>>, %arg3: memref<1x16xf32, #tpu.memory_space<vmem>>, %arg4: memref<16x128xf32, #tpu.memory_space<vmem>>, %arg5: memref<1x128xf32, #tpu.memory_space<vmem>>, %arg6: memref<8x128xf32, #tpu.memory_space<vmem>>) attributes {dimension_semantics = [#tpu.dimension_semantics<parallel>], iteration_bounds = array<i64: 1>, scalar_prefetch = 0 : i64, scratch_operands = 0 : i64, tpu.core_type = #tpu.core_type<tc>, window_params = [{transform_indices = @transform_0, window_bounds = array<i64: 8, 128>}, {pipeline_mode = #tpu.pipeline_mode<synchronous>, transform_indices = @transform_1, window_bounds = array<i64: 128, 16>}, {pipeline_mode = #tpu.pipeline_mode<synchronous>, transform_indices = @transform_2, window_bounds = array<i64: 1, 16>}, {pipeline_mode = #tpu.pipeline_mode<synchronous>, transform_indices = @transform_3, window_bounds = array<i64: 16, 128>}, {pipeline_mode = #tpu.pipeline_mode<synchronous>, transform_indices = @transform_4, window_bounds = array<i64: 1, 128>}, {transform_indices = @transform_5, window_bounds = array<i64: 8, 128>}]} {
    %c0 = arith.constant 0 : index
    %c0_0 = arith.constant 0 : index
    %0 = vector.load %arg1[%c0, %c0_0] : memref<8x128xf32, #tpu.memory_space<vmem>>, vector<8x128xf32>
    %c0_1 = arith.constant 0 : index
    %c0_2 = arith.constant 0 : index
    %1 = vector.load %arg2[%c0_1, %c0_2] : memref<128x16xf32, #tpu.memory_space<vmem>>, vector<128x16xf32>
    %cst = arith.constant dense<0.000000e+00> : vector<8x16xf32>
    %2 = tpu.matmul %0, %1, %cst {dimension_numbers = #tpu.dot_dimension_numbers<[1], [0], [0], [1], [0, 0, 1, 1], [], []>} : vector<8x128xf32>, vector<128x16xf32>, vector<8x16xf32> -> vector<8x16xf32>
    %c0_3 = arith.constant 0 : index
    %c0_4 = arith.constant 0 : index
    %3 = vector.load %arg3[%c0_3, %c0_4] : memref<1x16xf32, #tpu.memory_space<vmem>>, vector<1x16xf32>
    %4 = vector.broadcast %3 : vector<1x16xf32> to vector<8x16xf32>
    %5 = arith.addf %2, %4 : vector<8x16xf32>
    %cst_5 = arith.constant 0.000000e+00 : f32
    %6 = vector.broadcast %cst_5 : f32 to vector<8x16xf32>
    %7 = arith.maximumf %5, %6 : vector<8x16xf32>
    %c0_6 = arith.constant 0 : index
    %c0_7 = arith.constant 0 : index
    %8 = vector.load %arg4[%c0_6, %c0_7] : memref<16x128xf32, #tpu.memory_space<vmem>>, vector<16x128xf32>
    %cst_8 = arith.constant dense<0.000000e+00> : vector<8x128xf32>
    %9 = tpu.matmul %7, %8, %cst_8 {dimension_numbers = #tpu.dot_dimension_numbers<[1], [0], [0], [1], [0, 0, 1, 1], [], []>} : vector<8x16xf32>, vector<16x128xf32>, vector<8x128xf32> -> vector<8x128xf32>
    %c0_9 = arith.constant 0 : index
    %c0_10 = arith.constant 0 : index
    %10 = vector.load %arg5[%c0_9, %c0_10] : memref<1x128xf32, #tpu.memory_space<vmem>>, vector<1x128xf32>
    %11 = vector.broadcast %10 : vector<1x128xf32> to vector<8x128xf32>
    %12 = arith.addf %9, %11 : vector<8x128xf32>
    %c0_11 = arith.constant 0 : index
    %c0_12 = arith.constant 0 : index
    %13 = vector.load %arg6[%c0_11, %c0_12] : memref<8x128xf32, #tpu.memory_space<vmem>>, vector<8x128xf32>
    tpu.vector_store %arg6[%c0_11, %c0_12], %12 {strides = array<i32>} : memref<8x128xf32, #tpu.memory_space<vmem>>, vector<8x128xf32>,
    return
  }
  func.func @transform_0(%arg0: i32) -> (i32, i32) {
    %c0_i32 = arith.constant 0 : i32
    %c0_i32_0 = arith.constant 0 : i32
    return %arg0, %c0_i32 : i32, i32
  }
  func.func @transform_1(%arg0: i32) -> (i32, i32) {
    %c0_i32 = arith.constant 0 : i32
    %c0_i32_0 = arith.constant 0 : i32
    %c0_i32_1 = arith.constant 0 : i32
    return %c0_i32, %c0_i32_0 : i32, i32
  }
  func.func @transform_2(%arg0: i32) -> (i32, i32) {
    %c0_i32 = arith.constant 0 : i32
    %c0_i32_0 = arith.constant 0 : i32
    %c0_i32_1 = arith.constant 0 : i32
    return %c0_i32, %c0_i32_0 : i32, i32
  }
  func.func @transform_3(%arg0: i32) -> (i32, i32) {
    %c0_i32 = arith.constant 0 : i32
    %c0_i32_0 = arith.constant 0 : i32
    %c0_i32_1 = arith.constant 0 : i32
    return %c0_i32, %c0_i32_0 : i32, i32
  }
  func.func @transform_4(%arg0: i32) -> (i32, i32) {
    %c0_i32 = arith.constant 0 : i32
    %c0_i32_0 = arith.constant 0 : i32
    %c0_i32_1 = arith.constant 0 : i32
    return %c0_i32, %c0_i32_0 : i32, i32
  }
  func.func @transform_5(%arg0: i32) -> (i32, i32) {
    %c0_i32 = arith.constant 0 : i32
    %c0_i32_0 = arith.constant 0 : i32
    return %arg0, %c0_i32 : i32, i32
  }
}

</mosaic_0001>

<llo_original>
// kernel: tpu_custom_call.1
$region0: #{tpu_custom_call.1}
  #allocation0 [shape = 'u32[]', space=smem, size = 0x4, offset = 0x4, fixed_abs, tag = 'smem constant byte address 0x4 - core index']
  #allocation1 [shape = 'u32[144,128]{1,0:T(1,128)}', space=vmem, size = 0x12000, scoped, tag = 'internal scratch']
  %s0 = inlined_call_operand.vmem [shape: f32[8,128], index: 0, kind: input, shape index: {}]
  %s1 = inlined_call_operand.vmem [shape: f32[128,16], index: 1, kind: input, shape index: {}]
  %s2 = inlined_call_operand.vmem [shape: f32[1,16], index: 2, kind: input, shape index: {}]
  %s3 = inlined_call_operand.vmem [shape: f32[16,128], index: 3, kind: input, shape index: {}]
  %s4 = inlined_call_operand.vmem [shape: f32[1,128], index: 4, kind: input, shape index: {}]
  %s5 = inlined_call_operand.hbm [shape: f32[8,128], index: 5, kind: output, shape index: {}]
  %s6 = sld [smem:[#allocation0]]
  $region30: #{tpu_custom_call.1} parent=0
    _
  %s8 = ssub.s32 1, %s6
  %s9 = scalar_select 0, %s8, %s6
  $region1: #{tpu_custom_call.1} parent=0
    #allocation2 [shape = 'u8[4096]{0}', space=vmem, size = 0x1000, scoped, tag = 'output window, operand 0, single buffered']
    #allocation3 [shape = 's32[1]{0}', space=sflag, size = 0x4, scoped, tag = 'scoped memory for tpu_custom_call.1']
    %10 = vsyncpa [#allocation3], 0
    // Predicated region
    $region2: #{tpu_custom_call.1} parent=1 // pred_check
      _
    $region3: #{tpu_custom_call.1} parent=1 // pred_check_branch
      %12 = sbr.rel (0) target = $region5
    $region4: #{tpu_custom_call.1} parent=1 // pred_region
      _
    $region5: #{tpu_custom_call.1} parent=1 // pred_fallthru
      _
    // Predicated region
    $region6: #{tpu_custom_call.1} parent=1 // pred_check
      _
    $region7: #{tpu_custom_call.1} parent=1 // pred_check_branch
      %14 = sbr.rel (0) target = $region9
    $region8: #{tpu_custom_call.1} parent=1 // pred_region
      _
    $region9: #{tpu_custom_call.1} parent=1 // pred_fallthru
      _
    // Predicated region
    $region10: #{tpu_custom_call.1} parent=1 // pred_check
      _
    $region11: #{tpu_custom_call.1} parent=1 // pred_check_branch
      %16 = sbr.rel (0) target = $region13
    $region12: #{tpu_custom_call.1} parent=1 // pred_region
      _
    $region13: #{tpu_custom_call.1} parent=1 // pred_fallthru
      _
    // Predicated region
    $region14: #{tpu_custom_call.1} parent=1 // pred_check
      _
    $region15: #{tpu_custom_call.1} parent=1 // pred_check_branch
      %18 = sbr.rel (0) target = $region17
    $region16: #{tpu_custom_call.1} parent=1 // pred_region
      _
    $region17: #{tpu_custom_call.1} parent=1 // pred_fallthru
      _
    // Predicated region
    $region18: #{tpu_custom_call.1} parent=1 // pred_check
      _
    $region19: #{tpu_custom_call.1} parent=1 // pred_check_branch
      %20 = sbr.rel (0) target = $region21
    $region20: #{tpu_custom_call.1} parent=1 // pred_region
      _
    $region21: #{tpu_custom_call.1} parent=1 // pred_fallthru
      _
    %v21 = vld [vmem:[%s0] sm:$0xff]
    %v22 = vld [vmem:[%s1] sm:$0xff]
    %v23 = vld [vmem:[%s1 + $0x8] sm:$0xff]
    %v24 = vld [vmem:[%s1 + $0x10] sm:$0xff]
    %v25 = vld [vmem:[%s1 + $0x18] sm:$0xff]
    %v26 = vld [vmem:[%s1 + $0x20] sm:$0xff]
    %v27 = vld [vmem:[%s1 + $0x28] sm:$0xff]
    %v28 = vld [vmem:[%s1 + $0x30] sm:$0xff]
    %v29 = vld [vmem:[%s1 + $0x38] sm:$0xff]
    %v30 = vld [vmem:[%s1 + $0x40] sm:$0xff]
    %v31 = vld [vmem:[%s1 + $0x48] sm:$0xff]
    %v32 = vld [vmem:[%s1 + $0x50] sm:$0xff]
    %v33 = vld [vmem:[%s1 + $0x58] sm:$0xff]
    %v34 = vld [vmem:[%s1 + $0x60] sm:$0xff]
    %v35 = vld [vmem:[%s1 + $0x68] sm:$0xff]
    %v36 = vld [vmem:[%s1 + $0x70] sm:$0xff]
    %v37 = vld [vmem:[%s1 + $0x78] sm:$0xff]
    %v38 = vld [vmem:[%s2] sm:$0x1]
    %v40 = vlaneseq
    %v41 = vshrl.u32 %v40, 7
    %v42 = vsub.s32 0, %v41
    %v43 = vrot.slane %v38, %v42
    %45 = vmatprep.subr.mxu0 0.0
    %46 = vmatpush1.msra.mxu0 %v37
    %47 = vmatprep.subr.mxu0 0.0
    %48 = vmatpush1.msra.mxu0 %v36
    %49 = vmatprep.subr.mxu0 0.0
    %50 = vmatpush1.msra.mxu0 %v35
    %51 = vmatprep.subr.mxu0 0.0
    %52 = vmatpush1.msra.mxu0 %v34
    %53 = vmatprep.subr.mxu0 0.0
    %54 = vmatpush1.msra.mxu0 %v33
    %55 = vmatprep.subr.mxu0 0.0
    %56 = vmatpush1.msra.mxu0 %v32
    %57 = vmatprep.subr.mxu0 0.0
    %58 = vmatpush1.msra.mxu0 %v31
    %59 = vmatprep.subr.mxu0 0.0
    %60 = vmatpush1.msra.mxu0 %v30
    %61 = vmatprep.subr.mxu0 0.0
    %62 = vmatpush1.msra.mxu0 %v29
    %63 = vmatprep.subr.mxu0 0.0
    %64 = vmatpush1.msra.mxu0 %v28
    %65 = vmatprep.subr.mxu0 0.0
    %66 = vmatpush1.msra.mxu0 %v27
    %67 = vmatprep.subr.mxu0 0.0
    %68 = vmatpush1.msra.mxu0 %v26
    %69 = vmatprep.subr.mxu0 0.0
    %70 = vmatpush1.msra.mxu0 %v25
    %71 = vmatprep.subr.mxu0 0.0
    %72 = vmatpush1.msra.mxu0 %v24
    %73 = vmatprep.subr.mxu0 0.0
    %74 = vmatpush1.msra.mxu0 %v23
    %75 = vmatprep.subr.mxu0 0.0
    %76 = vmatpush1.msra.mxu0 %v22
    %77 = vmatprep.subr.mxu0 0.0
    %78 = vmatpush2.msra.mxu0 0.0
    %79 = vmatprep.subr.mxu0 0.0
    %80 = vmatpush2.msra.mxu0 0.0
    %81 = vmatprep.subr.mxu0 0.0
    %82 = vmatpush2.msra.mxu0 0.0
    %83 = vmatprep.subr.mxu0 0.0
    %84 = vmatpush2.msra.mxu0 0.0
    %85 = vmatprep.subr.mxu0 0.0
    %86 = vmatpush2.msra.mxu0 0.0
    %87 = vmatprep.subr.mxu0 0.0
    %88 = vmatpush2.msra.mxu0 0.0
    %89 = vmatprep.subr.mxu0 0.0
    %90 = vmatpush2.msra.mxu0 0.0
    %91 = vmatprep.subr.mxu0 0.0
    %92 = vmatpush2.msra.mxu0 0.0
    %93 = vmatprep.subr.mxu0 0.0
    %94 = vmatpush2.msra.mxu0 0.0
    %95 = vmatprep.subr.mxu0 0.0
    %96 = vmatpush2.msra.mxu0 0.0
    %97 = vmatprep.subr.mxu0 0.0
    %98 = vmatpush2.msra.mxu0 0.0
    %99 = vmatprep.subr.mxu0 0.0
    %100 = vmatpush2.msra.mxu0 0.0
    %101 = vmatprep.subr.mxu0 0.0
    %102 = vmatpush2.msra.mxu0 0.0
    %103 = vmatprep.subr.mxu0 0.0
    %104 = vmatpush2.msra.mxu0 0.0
    %105 = vmatprep.subr.mxu0 0.0
    %106 = vmatpush2.msra.mxu0 0.0
    %107 = vmatprep.subr.mxu0 0.0
    %108 = vmatpush2.msra.mxu0 0.0
    %109 = vmatprep.mubr.f32.mxu0 0.0
    %110 = vmatmul.mubr.f32.gmra.mxu0 %v21
    %v111 = vpop.f32.mrf.mxu0
    %v112 = vadd.f32 %v43, %v111
    %v113 = vpop.f32.mrf.mxu0
    %114 = vdwg.mxu0
    %v115 = vmax.f32 %v112, 0.0
    %v116 = vld [vmem:[%s3] sm:$0xff]
    %v117 = vld [vmem:[%s3 + $0x8] sm:$0xff]
    %v118 = vld [vmem:[%s4] sm:$0x1]
    %v120 = vlaneseq
    %v121 = vshrl.u32 %v120, 7
    %v122 = vsub.s32 0, %v121
    %v123 = vrot.slane %v118, %v122
    %vm125 = vcmask 130048
    %v127 = vsel %vm125, %v115, 0
    %129 = vmatprep.subr.mxu0 0.0
    %130 = vmatpush1.msra.mxu0 0.0
    %131 = vmatprep.subr.mxu0 0.0
    %132 = vmatpush1.msra.mxu0 0.0
    %133 = vmatprep.subr.mxu0 0.0
    %134 = vmatpush1.msra.mxu0 0.0
    %135 = vmatprep.subr.mxu0 0.0
    %136 = vmatpush1.msra.mxu0 0.0
    %137 = vmatprep.subr.mxu0 0.0
    %138 = vmatpush1.msra.mxu0 0.0
    %139 = vmatprep.subr.mxu0 0.0
    %140 = vmatpush1.msra.mxu0 0.0
    %141 = vmatprep.subr.mxu0 0.0
    %142 = vmatpush1.msra.mxu0 0.0
    %143 = vmatprep.subr.mxu0 0.0
    %144 = vmatpush1.msra.mxu0 0.0
    %145 = vmatprep.subr.mxu0 0.0
    %146 = vmatpush1.msra.mxu0 0.0
    %147 = vmatprep.subr.mxu0 0.0
    %148 = vmatpush1.msra.mxu0 0.0
    %149 = vmatprep.subr.mxu0 0.0
    %150 = vmatpush1.msra.mxu0 0.0
    %151 = vmatprep.subr.mxu0 0.0
    %152 = vmatpush1.msra.mxu0 0.0
    %153 = vmatprep.subr.mxu0 0.0
    %154 = vmatpush1.msra.mxu0 0.0
    %155 = vmatprep.subr.mxu0 0.0
    %156 = vmatpush1.msra.mxu0 0.0
    %157 = vmatprep.subr.mxu0 0.0
    %158 = vmatpush1.msra.mxu0 %v117
    %159 = vmatprep.subr.mxu0 0.0
    %160 = vmatpush1.msra.mxu0 %v116
    %161 = vmatprep.subr.mxu0 0.0
    %162 = vmatpush2.msra.mxu0 0.0
    %163 = vmatprep.subr.mxu0 0.0
    %164 = vmatpush2.msra.mxu0 0.0
    %165 = vmatprep.subr.mxu0 0.0
    %166 = vmatpush2.msra.mxu0 0.0
    %167 = vmatprep.subr.mxu0 0.0
    %168 = vmatpush2.msra.mxu0 0.0
    %169 = vmatprep.subr.mxu0 0.0
    %170 = vmatpush2.msra.mxu0 0.0
    %171 = vmatprep.subr.mxu0 0.0
    %172 = vmatpush2.msra.mxu0 0.0
    %173 = vmatprep.subr.mxu0 0.0
    %174 = vmatpush2.msra.mxu0 0.0
    %175 = vmatprep.subr.mxu0 0.0
    %176 = vmatpush2.msra.mxu0 0.0
    %177 = vmatprep.subr.mxu0 0.0
    %178 = vmatpush2.msra.mxu0 0.0
    %179 = vmatprep.subr.mxu0 0.0
    %180 = vmatpush2.msra.mxu0 0.0
    %181 = vmatprep.subr.mxu0 0.0
    %182 = vmatpush2.msra.mxu0 0.0
    %183 = vmatprep.subr.mxu0 0.0
    %184 = vmatpush2.msra.mxu0 0.0
    %185 = vmatprep.subr.mxu0 0.0
    %186 = vmatpush2.msra.mxu0 0.0
    %187 = vmatprep.subr.mxu0 0.0
    %188 = vmatpush2.msra.mxu0 0.0
    %189 = vmatprep.subr.mxu0 0.0
    %190 = vmatpush2.msra.mxu0 0.0
    %191 = vmatprep.subr.mxu0 0.0
    %192 = vmatpush2.msra.mxu0 0.0
    %193 = vmatprep.mubr.f32.mxu0 0.0
    %194 = vmatmul.mubr.f32.gmra.mxu0 %v127
    %v195 = vpop.f32.mrf.mxu0
    %v196 = vadd.f32 %v123, %v195
    %v197 = vpop.f32.mrf.mxu0
    %198 = vdwg.mxu0
    %199 = vst [vmem:[#allocation2] sm:$0xff] %v196
    // Predicated region
    $region22: #{tpu_custom_call.1} parent=1 // pred_check
      _
    $region23: #{tpu_custom_call.1} parent=1 // pred_check_branch
      %201 = sbr.rel (0) target = $region25
    $region24: #{tpu_custom_call.1} parent=1 // pred_region
      %s203 = ssub.s32 128, 128
      %204 = vsyncadd [#allocation3], %s203
      %s206 = sshll.u32 [#allocation2], 4
      %s207 = int_to_ptr.vmem [resolvable:$true] %s206
      %209 = dma.vmem_to_hbm [thread:$0]  %s207, 128, %s5, [#allocation3]
    $region25: #{tpu_custom_call.1} parent=1 // pred_fallthru
      _
    // Predicated region
    $region26: #{tpu_custom_call.1} parent=1 // pred_check
      _
    $region27: #{tpu_custom_call.1} parent=1 // pred_check_branch
      %211 = sbr.rel (0) target = $region29
    $region28: #{tpu_custom_call.1} parent=1 // pred_region
      %212 = dma.done [#allocation3], 128
    $region29: #{tpu_custom_call.1} parent=1 // pred_fallthru
      _
    %213 = vsyncpa [#allocation3], 1

</llo_original>
